<compile_context>
chip_gen: v5e
topology: v5e:2x2
jax: 0.10.0
libtpu: 0.0.40
codegen_flags: <defaults>
</compile_context>

<pallas_src>
import functools

import jax
import jax.numpy as jnp
from jax import lax
from jax.experimental import pallas as pl
from jax.experimental.pallas import tpu as pltpu

NUM_CLASS = 10  # "num_class" global in the original script


def _spread_loss_kernel(m_ref, yhat_ref, y_ref, out_ref, acc_ref, *, batch_size):
    """One batch tile of the spread loss.

    m_ref    : (1, 1) f32 SMEM  -- margin (runtime scalar)
    yhat_ref : (TB, C) f32 VMEM -- class activations for this batch tile
    y_ref    : (TB, 1) i32 VMEM -- labels for this batch tile
    out_ref  : (1, 1) f32 SMEM  -- mean loss, written at the last grid step
    acc_ref  : (1,)   f32 SMEM  -- running sum over tiles
    """
    pid = pl.program_id(0)
    last = pl.num_programs(0) - 1

    @pl.when(pid == 0)
    def _():
        acc_ref[0] = jnp.float32(0.0)

    m = m_ref[0, 0]
    yhat = yhat_ref[...]                                   # (TB, C) f32
    labels = y_ref[...]                                    # (TB, 1) i32
    tb, c = yhat.shape

    # One-hot kept as a boolean mask (never materialized as float).
    class_ids = lax.broadcasted_iota(jnp.int32, (tb, c), 1)
    is_target = class_ids == labels                        # (TB, C) bool

    # a_t = activation of the target class, per row.
    a_t = jnp.sum(jnp.where(is_target, yhat, 0.0), axis=1, keepdims=True)  # (TB, 1)

    # margins = (m - (a_t - y_hat)) on non-target classes, 0 on the target class.
    margins = jnp.where(is_target, 0.0, m - a_t + yhat)    # (TB, C)
    hinge = jnp.maximum(margins, 0.0)
    per_elem = hinge * hinge                               # (TB, C)

    # Mask rows past the true batch size (grid padding on the last tile).
    row_ids = pid * tb + lax.broadcasted_iota(jnp.int32, (tb, c), 0)
    per_elem = jnp.where(row_ids < batch_size, per_elem, 0.0)

    # Single combined reduction for this tile, accumulated across the grid.
    acc_ref[0] += jnp.sum(per_elem)

    @pl.when(pid == last)
    def _():
        out_ref[0, 0] = acc_ref[0] * jnp.float32(1.0 / batch_size)


def _choose_batch_tile(batch_size):
    # Multiples of 8 (sublane); big tiles amortize the ~0.35us/step pipeline
    # overhead; cap at 1024 rows so the double-buffered tile stays far below
    # the v7x 32 MiB scoped-VMEM default (512 KiB per buffer when lane-padded).
    if batch_size <= 1024:
        return max(8, ((batch_size + 7) // 8) * 8)
    return 1024


def spread_loss_ref(y_hat, y, m=0.2):
    """Pure-JAX reference matching the PyTorch forward (uses the current m)."""
    y = jnp.asarray(y, dtype=jnp.int32).reshape(-1)
    y_hat = jnp.asarray(y_hat, dtype=jnp.float32)
    y_onehot = jax.nn.one_hot(y, y_hat.shape[1], dtype=jnp.float32)
    a_t = jnp.sum(y_onehot * y_hat, axis=1, keepdims=True)
    margins = (m - (a_t - y_hat)) * (1.0 - y_onehot)
    loss_per_caps = jnp.maximum(margins, 0.0) ** 2
    return jnp.mean(jnp.sum(loss_per_caps, axis=1))


def update_margin(m, numiter):
    """The module's in-forward schedule of self.m (training-state mutation,
    applied after the loss value is computed); pure JAX, no kernel needed."""
    new_m = 0.2 + 0.79 * jax.nn.sigmoid(jnp.minimum(10.0, numiter / 50000.0 - 4.0))
    return jnp.where(m < 0.9, new_m, m)


def spread_loss(y_hat, y, m=0.2, *, batch_tile=None, force_pallas=False):
    """y_hat: (B, num_class) f32, y: (B,) or (B,1) int labels, m: margin scalar
    -> scalar f32 mean spread loss."""
    y_hat = jnp.asarray(y_hat, dtype=jnp.float32)
    y = jnp.asarray(y, dtype=jnp.int32).reshape(-1, 1)     # (B, 1)
    batch, num_class = y_hat.shape

    # Tiny problems: XLA fusion beats the pallas_call dispatch + step overhead.
    if not force_pallas and batch * num_class < 64 * 128:
        return spread_loss_ref(y_hat, y, m)

    tb = batch_tile if batch_tile is not None else _choose_batch_tile(batch)
    grid = (pl.cdiv(batch, tb),)
    m_arr = jnp.full((1, 1), m, dtype=jnp.float32)         # runtime scalar in SMEM

    kernel = functools.partial(_spread_loss_kernel, batch_size=batch)

    out = pl.pallas_call(
        kernel,
        out_shape=jax.ShapeDtypeStruct((1, 1), jnp.float32),
        grid_spec=pltpu.PrefetchScalarGridSpec(
            num_scalar_prefetch=0,
            grid=grid,
            in_specs=[
                pl.BlockSpec(memory_space=pltpu.SMEM),             # m scalar
                pl.BlockSpec((tb, num_class), lambda i: (i, 0)),   # y_hat tile
                pl.BlockSpec((tb, 1), lambda i: (i, 0)),           # labels tile
            ],
            out_specs=pl.BlockSpec(memory_space=pltpu.SMEM),       # (1,1) scalar result
            scratch_shapes=[pltpu.SMEM((1,), jnp.float32)],        # running sum
        ),
        compiler_params=pltpu.CompilerParams(
            # Grid axis carries the SMEM accumulator -> must be "arbitrary".
            # TODO(synk): on v7x (2 TCs) a per-tile-partial output with
            # "parallel" semantics + a JAX-side mean would shard across cores.
            dimension_semantics=("arbitrary",),
        ),
    )(m_arr, y_hat, y)
    return out[0, 0]


if __name__ == "__main__":
    key = jax.random.PRNGKey(0)
    k1, k2 = jax.random.split(key)

    B = 200
    y_hat = jax.random.uniform(k1, (B, NUM_CLASS), dtype=jnp.float32)  # activations in [0,1]
    Y = jax.random.randint(k2, (B,), 0, NUM_CLASS, dtype=jnp.int32)    # labels
    m0 = 0.2

    # Single-tile path (TB == B, B is a multiple of 8).
    loss_single = jax.block_until_ready(spread_loss(y_hat, Y, m0, force_pallas=True))
    # Multi-tile path with a masked tail: 4 tiles of 64 rows over 200 rows.
    loss_tiled = jax.block_until_ready(
        spread_loss(y_hat, Y, m0, batch_tile=64, force_pallas=True)
    )
    ref = jax.block_until_ready(spread_loss_ref(y_hat, Y, m0))

    assert jnp.allclose(loss_single, ref, rtol=1e-5, atol=1e-5), (loss_single, ref)
    assert jnp.allclose(loss_tiled, ref, rtol=1e-5, atol=1e-5), (loss_tiled, ref)

    # Margin schedule (the module's training-state side effect), kept in JAX.
    _ = jax.block_until_ready(update_margin(jnp.float32(m0), numiter=0))

    print("KERNEL_OK")
</pallas_src>

<mosaic_0001>
module attributes {stable_mosaic.version = 11 : i64} {
  func.func @_spread_loss_kernel(%arg0: i32, %arg1: memref<1x1xf32, #tpu.memory_space<smem>>, %arg2: memref<200x10xf32, #tpu.memory_space<vmem>>, %arg3: memref<200x1xi32, #tpu.memory_space<vmem>>, %arg4: memref<1x1xf32, #tpu.memory_space<smem>>, %arg5: memref<1xf32, #tpu.memory_space<smem>>) attributes {dimension_semantics = [#tpu.dimension_semantics<arbitrary>], iteration_bounds = array<i64: 1>, scalar_prefetch = 0 : i64, scratch_operands = 1 : i64, tpu.core_type = #tpu.core_type<tc>, window_params = [{transform_indices = @transform_0, window_bounds = array<i64: 1, 1>}, {transform_indices = @transform_1, window_bounds = array<i64: 200, 10>}, {transform_indices = @transform_2, window_bounds = array<i64: 200, 1>}, {transform_indices = @transform_3, window_bounds = array<i64: 1, 1>}]} {
    %c0_i32 = arith.constant 0 : i32
    %0 = arith.cmpi eq, %arg0, %c0_i32 : i32
    %1 = arith.extui %0 : i1 to i32
    %c0_i32_0 = arith.constant 0 : i32
    %2 = arith.cmpi ne, %1, %c0_i32_0 : i32
    scf.if %2 {
      %cst_16 = arith.constant 0.000000e+00 : f32
      %c0_17 = arith.constant 0 : index
      %40 = memref.load %arg5[%c0_17] : memref<1xf32, #tpu.memory_space<smem>>
      memref.store %cst_16, %arg5[%c0_17] : memref<1xf32, #tpu.memory_space<smem>>
    } else {
    }
    %c0 = arith.constant 0 : index
    %c0_1 = arith.constant 0 : index
    %3 = memref.load %arg1[%c0, %c0_1] : memref<1x1xf32, #tpu.memory_space<smem>>
    %c0_2 = arith.constant 0 : index
    %c0_3 = arith.constant 0 : index
    %4 = vector.load %arg2[%c0_2, %c0_3] : memref<200x10xf32, #tpu.memory_space<vmem>>, vector<200x10xf32>
    %c0_4 = arith.constant 0 : index
    %c0_5 = arith.constant 0 : index
    %5 = vector.load %arg3[%c0_4, %c0_5] : memref<200x1xi32, #tpu.memory_space<vmem>>, vector<200x1xi32>
    %6 = tpu.iota {dimensions = array<i32: 1>} : vector<200x10xi32>
    %7 = vector.broadcast %5 : vector<200x1xi32> to vector<200x10xi32>
    %8 = arith.cmpi eq, %6, %7 : vector<200x10xi32>
    %cst = arith.constant 0.000000e+00 : f32
    %9 = vector.broadcast %cst : f32 to vector<200x10xf32>
    %10 = arith.select %8, %4, %9 : vector<200x10xi1>, vector<200x10xf32>
    %cst_6 = arith.constant dense<0.000000e+00> : vector<200xf32>
    %11 = vector.multi_reduction <add>, %10, %cst_6 [1] : vector<200x10xf32> to vector<200xf32>
    %12 = vector.shape_cast %11 : vector<200xf32> to vector<200x1xf32>
    %13 = vector.broadcast %3 : f32 to vector<200x1xf32>
    %14 = arith.subf %13, %12 : vector<200x1xf32>
    %15 = vector.broadcast %14 : vector<200x1xf32> to vector<200x10xf32>
    %16 = arith.addf %15, %4 : vector<200x10xf32>
    %cst_7 = arith.constant 0.000000e+00 : f32
    %17 = vector.broadcast %cst_7 : f32 to vector<200x10xf32>
    %18 = arith.select %8, %17, %16 : vector<200x10xi1>, vector<200x10xf32>
    %cst_8 = arith.constant 0.000000e+00 : f32
    %19 = vector.broadcast %cst_8 : f32 to vector<200x10xf32>
    %20 = arith.maximumf %18, %19 : vector<200x10xf32>
    %21 = arith.mulf %20, %20 : vector<200x10xf32>
    %c200_i32 = arith.constant 200 : i32
    %22 = arith.muli %arg0, %c200_i32 : i32
    %23 = tpu.iota {dimensions = array<i32: 0>} : vector<200x10xi32>
    %24 = vector.broadcast %22 : i32 to vector<200x10xi32>
    %25 = arith.addi %24, %23 : vector<200x10xi32>
    %c200_i32_9 = arith.constant 200 : i32
    %26 = vector.broadcast %c200_i32_9 : i32 to vector<200x10xi32>
    %27 = arith.cmpi slt, %25, %26 : vector<200x10xi32>
    %cst_10 = arith.constant 0.000000e+00 : f32
    %28 = vector.broadcast %cst_10 : f32 to vector<200x10xf32>
    %29 = arith.select %27, %21, %28 : vector<200x10xi1>, vector<200x10xf32>
    %c0_11 = arith.constant 0 : index
    %30 = memref.load %arg5[%c0_11] : memref<1xf32, #tpu.memory_space<smem>>
    %31 = vector.shape_cast %29 : vector<200x10xf32> to vector<1x200x10xf32>
    %cst_12 = arith.constant dense<0.000000e+00> : vector<1xf32>
    %32 = vector.multi_reduction <add>, %31, %cst_12 [1, 2] : vector<1x200x10xf32> to vector<1xf32>
    %33 = vector.shape_cast %32 : vector<1xf32> to vector<1x1x1xf32>
    %34 = vector.extract %33[0, 0, 0] : f32 from vector<1x1x1xf32>
    %35 = arith.addf %30, %34 : f32
    %c0_13 = arith.constant 0 : index
    %36 = memref.load %arg5[%c0_13] : memref<1xf32, #tpu.memory_space<smem>>
    memref.store %35, %arg5[%c0_13] : memref<1xf32, #tpu.memory_space<smem>>
    %c0_i32_14 = arith.constant 0 : i32
    %37 = arith.cmpi eq, %arg0, %c0_i32_14 : i32
    %38 = arith.extui %37 : i1 to i32
    %c0_i32_15 = arith.constant 0 : i32
    %39 = arith.cmpi ne, %38, %c0_i32_15 : i32
    scf.if %39 {
      %c0_16 = arith.constant 0 : index
      %40 = memref.load %arg5[%c0_16] : memref<1xf32, #tpu.memory_space<smem>>
      %cst_17 = arith.constant 5.000000e-03 : f32
      %41 = arith.mulf %40, %cst_17 : f32
      %c0_18 = arith.constant 0 : index
      %c0_19 = arith.constant 0 : index
      %42 = memref.load %arg4[%c0_18, %c0_19] : memref<1x1xf32, #tpu.memory_space<smem>>
      memref.store %41, %arg4[%c0_18, %c0_19] : memref<1x1xf32, #tpu.memory_space<smem>>
    } else {
    }
    return
  }
  func.func @transform_0(%arg0: i32) -> (i32, i32) {
    %c0_i32 = arith.constant 0 : i32
    %c0_i32_0 = arith.constant 0 : i32
    %c0_i32_1 = arith.constant 0 : i32
    return %c0_i32, %c0_i32_0 : i32, i32
  }
  func.func @transform_1(%arg0: i32) -> (i32, i32) {
    %c0_i32 = arith.constant 0 : i32
    %c0_i32_0 = arith.constant 0 : i32
    return %arg0, %c0_i32 : i32, i32
  }
  func.func @transform_2(%arg0: i32) -> (i32, i32) {
    %c0_i32 = arith.constant 0 : i32
    %c0_i32_0 = arith.constant 0 : i32
    return %arg0, %c0_i32 : i32, i32
  }
  func.func @transform_3(%arg0: i32) -> (i32, i32) {
    %c0_i32 = arith.constant 0 : i32
    %c0_i32_0 = arith.constant 0 : i32
    %c0_i32_1 = arith.constant 0 : i32
    return %c0_i32, %c0_i32_0 : i32, i32
  }
}

</mosaic_0001>

<llo_original>
// kernel: tpu_custom_call.1
$region0: #{tpu_custom_call.1}
  #allocation0 [shape = 'u32[]', space=smem, size = 0x4, offset = 0x4, fixed_abs, tag = 'smem constant byte address 0x4 - core index']
  #allocation1 [shape = 'u32[72,128]{1,0:T(1,128)}', space=vmem, size = 0x9000, scoped, tag = 'internal scratch']
  #allocation2 [shape = 'f32[1]{0:T(128)}', space=smem, size = 0x200, scoped, tag = 'scratch operand']
  #allocation3 [shape = 'f32[1,1]{1,0:T(1,128)S(6)}', space=smem, size = 0x200, scoped, tag = 'scoped memory for tpu_custom_call.1']
  %s0 = inlined_call_operand.<no memory space> [shape: f32[1,1], index: 0, kind: input, shape index: {}]
  %s1 = inlined_call_operand.vmem [shape: f32[200,10], index: 1, kind: input, shape index: {}]
  %s2 = inlined_call_operand.vmem [shape: s32[200,1], index: 2, kind: input, shape index: {}]
  %s3 = inlined_call_operand.hbm [shape: f32[1,1], index: 3, kind: output, shape index: {}]
  %s4 = sld [smem:[#allocation0]]
  $region30: #{tpu_custom_call.1} parent=0
    _
  %s6 = ssub.s32 1, %s4
  %s7 = scalar_select 0, %s6, %s4
  %8 = sst [smem:[#allocation3]] %s0
  $region1: #{tpu_custom_call.1} parent=0
    #allocation4 [shape = 'u8[512]{0}', space=smem, size = 0x200, scoped, tag = 'output window, operand 0, single buffered']
    #allocation5 [shape = 's32[1]{0}', space=sflag, size = 0x4, scoped, tag = 'scoped memory for tpu_custom_call.1']
    %9 = vsyncpa [#allocation5], 0
    // Predicated region
    $region2: #{tpu_custom_call.1} parent=1 // pred_check
      _
    $region3: #{tpu_custom_call.1} parent=1 // pred_check_branch
      %11 = sbr.rel (0) target = $region5
    $region4: #{tpu_custom_call.1} parent=1 // pred_region
      _
    $region5: #{tpu_custom_call.1} parent=1 // pred_fallthru
      _
    // Predicated region
    $region6: #{tpu_custom_call.1} parent=1 // pred_check
      _
    $region7: #{tpu_custom_call.1} parent=1 // pred_check_branch
      %13 = sbr.rel (0) target = $region9
    $region8: #{tpu_custom_call.1} parent=1 // pred_region
      _
    $region9: #{tpu_custom_call.1} parent=1 // pred_fallthru
      _
    // Predicated region
    $region10: #{tpu_custom_call.1} parent=1 // pred_check
      _
    $region11: #{tpu_custom_call.1} parent=1 // pred_check_branch
      %15 = sbr.rel (0) target = $region13
    $region12: #{tpu_custom_call.1} parent=1 // pred_region
      _
    $region13: #{tpu_custom_call.1} parent=1 // pred_fallthru
      _
    %p16 = scmp.eq.s32.totalorder 0, 0
    // Predicated region
    $region14: #{tpu_custom_call.1} parent=1 // pred_check
      %p17 = pneg %p16
    $region15: #{tpu_custom_call.1} parent=1 // pred_check_branch
      %19 = sbr.rel (%p17) target = $region17
    $region16: #{tpu_custom_call.1} parent=1 // pred_region
      %s20 = scalar_lea.smem [#allocation2], 0
      %21 = sst [smem:[%s20]] 0.0
    $region17: #{tpu_custom_call.1} parent=1 // pred_fallthru
      _
    %s22 = sld [smem:[#allocation3]]
    %v23 = vld [vmem:[%s1] sm:$0xff]
    %v24 = vld [vmem:[%s1 + $0x8] sm:$0xff]
    %v25 = vld [vmem:[%s1 + $0x10] sm:$0xff]
    %v26 = vld [vmem:[%s1 + $0x18] sm:$0xff]
    %v27 = vld [vmem:[%s1 + $0x20] sm:$0xff]
    %v28 = vld [vmem:[%s1 + $0x28] sm:$0xff]
    %v29 = vld [vmem:[%s1 + $0x30] sm:$0xff]
    %v30 = vld [vmem:[%s1 + $0x38] sm:$0xff]
    %v31 = vld [vmem:[%s1 + $0x40] sm:$0xff]
    %v32 = vld [vmem:[%s1 + $0x48] sm:$0xff]
    %v33 = vld [vmem:[%s1 + $0x50] sm:$0xff]
    %v34 = vld [vmem:[%s1 + $0x58] sm:$0xff]
    %v35 = vld [vmem:[%s1 + $0x60] sm:$0xff]
    %v36 = vld [vmem:[%s1 + $0x68] sm:$0xff]
    %v37 = vld [vmem:[%s1 + $0x70] sm:$0xff]
    %v38 = vld [vmem:[%s1 + $0x78] sm:$0xff]
    %v39 = vld [vmem:[%s1 + $0x80] sm:$0xff]
    %v40 = vld [vmem:[%s1 + $0x88] sm:$0xff]
    %v41 = vld [vmem:[%s1 + $0x90] sm:$0xff]
    %v42 = vld [vmem:[%s1 + $0x98] sm:$0xff]
    %v43 = vld [vmem:[%s1 + $0xa0] sm:$0xff]
    %v44 = vld [vmem:[%s1 + $0xa8] sm:$0xff]
    %v45 = vld [vmem:[%s1 + $0xb0] sm:$0xff]
    %v46 = vld [vmem:[%s1 + $0xb8] sm:$0xff]
    %v47 = vld [vmem:[%s1 + $0xc0] sm:$0xff]
    %v48 = vld [vmem:[%s2] sm:$0xff]
    %v49 = vld [vmem:[%s2 + $0x8] sm:$0xff]
    %v50 = vld [vmem:[%s2 + $0x10] sm:$0xff]
    %v51 = vld [vmem:[%s2 + $0x18] sm:$0xff]
    %v52 = vld [vmem:[%s2 + $0x20] sm:$0xff]
    %v53 = vld [vmem:[%s2 + $0x28] sm:$0xff]
    %v54 = vld [vmem:[%s2 + $0x30] sm:$0xff]
    %v55 = vld [vmem:[%s2 + $0x38] sm:$0xff]
    %v56 = vld [vmem:[%s2 + $0x40] sm:$0xff]
    %v57 = vld [vmem:[%s2 + $0x48] sm:$0xff]
    %v58 = vld [vmem:[%s2 + $0x50] sm:$0xff]
    %v59 = vld [vmem:[%s2 + $0x58] sm:$0xff]
    %v60 = vld [vmem:[%s2 + $0x60] sm:$0xff]
    %v61 = vld [vmem:[%s2 + $0x68] sm:$0xff]
    %v62 = vld [vmem:[%s2 + $0x70] sm:$0xff]
    %v63 = vld [vmem:[%s2 + $0x78] sm:$0xff]
    %v64 = vld [vmem:[%s2 + $0x80] sm:$0xff]
    %v65 = vld [vmem:[%s2 + $0x88] sm:$0xff]
    %v66 = vld [vmem:[%s2 + $0x90] sm:$0xff]
    %v67 = vld [vmem:[%s2 + $0x98] sm:$0xff]
    %v68 = vld [vmem:[%s2 + $0xa0] sm:$0xff]
    %v69 = vld [vmem:[%s2 + $0xa8] sm:$0xff]
    %v70 = vld [vmem:[%s2 + $0xb0] sm:$0xff]
    %v71 = vld [vmem:[%s2 + $0xb8] sm:$0xff]
    %v72 = vld [vmem:[%s2 + $0xc0] sm:$0xff]
    %v73 = vlaneseq
    %v74 = vand.u32 %v73, 127
    %75 = vset.pattern.permute.xlu0 0
    %76 = vperm.xlu0 %75, %v48
    %v77 = vpop.permute.xlu0 %76
    %78 = vset.pattern.permute.xlu0 0
    %79 = vperm.xlu0 %78, %v49
    %v80 = vpop.permute.xlu0 %79
    %81 = vset.pattern.permute.xlu0 0
    %82 = vperm.xlu0 %81, %v50
    %v83 = vpop.permute.xlu0 %82
    %84 = vset.pattern.permute.xlu0 0
    %85 = vperm.xlu0 %84, %v51
    %v86 = vpop.permute.xlu0 %85
    %87 = vset.pattern.permute.xlu0 0
    %88 = vperm.xlu0 %87, %v52
    %v89 = vpop.permute.xlu0 %88
    %90 = vset.pattern.permute.xlu0 0
    %91 = vperm.xlu0 %90, %v53
    %v92 = vpop.permute.xlu0 %91
    %93 = vset.pattern.permute.xlu0 0
    %94 = vperm.xlu0 %93, %v54
    %v95 = vpop.permute.xlu0 %94
    %96 = vset.pattern.permute.xlu0 0
    %97 = vperm.xlu0 %96, %v55
    %v98 = vpop.permute.xlu0 %97
    %99 = vset.pattern.permute.xlu0 0
    %100 = vperm.xlu0 %99, %v56
    %v101 = vpop.permute.xlu0 %100
    %102 = vset.pattern.permute.xlu0 0
    %103 = vperm.xlu0 %102, %v57
    %v104 = vpop.permute.xlu0 %103
    %105 = vset.pattern.permute.xlu0 0
    %106 = vperm.xlu0 %105, %v58
    %v107 = vpop.permute.xlu0 %106
    %108 = vset.pattern.permute.xlu0 0
    %109 = vperm.xlu0 %108, %v59
    %v110 = vpop.permute.xlu0 %109
    %111 = vset.pattern.permute.xlu0 0
    %112 = vperm.xlu0 %111, %v60
    %v113 = vpop.permute.xlu0 %112
    %114 = vset.pattern.permute.xlu0 0
    %115 = vperm.xlu0 %114, %v61
    %v116 = vpop.permute.xlu0 %115
    %117 = vset.pattern.permute.xlu0 0
    %118 = vperm.xlu0 %117, %v62
    %v119 = vpop.permute.xlu0 %118
    %120 = vset.pattern.permute.xlu0 0
    %121 = vperm.xlu0 %120, %v63
    %v122 = vpop.permute.xlu0 %121
    %123 = vset.pattern.permute.xlu0 0
    %124 = vperm.xlu0 %123, %v64
    %v125 = vpop.permute.xlu0 %124
    %126 = vset.pattern.permute.xlu0 0
    %127 = vperm.xlu0 %126, %v65
    %v128 = vpop.permute.xlu0 %127
    %129 = vset.pattern.permute.xlu0 0
    %130 = vperm.xlu0 %129, %v66
    %v131 = vpop.permute.xlu0 %130
    %132 = vset.pattern.permute.xlu0 0
    %133 = vperm.xlu0 %132, %v67
    %v134 = vpop.permute.xlu0 %133
    %135 = vset.pattern.permute.xlu0 0
    %136 = vperm.xlu0 %135, %v68
    %v137 = vpop.permute.xlu0 %136
    %138 = vset.pattern.permute.xlu0 0
    %139 = vperm.xlu0 %138, %v69
    %v140 = vpop.permute.xlu0 %139
    %141 = vset.pattern.permute.xlu0 0
    %142 = vperm.xlu0 %141, %v70
    %v143 = vpop.permute.xlu0 %142
    %144 = vset.pattern.permute.xlu0 0
    %145 = vperm.xlu0 %144, %v71
    %v146 = vpop.permute.xlu0 %145
    %147 = vset.pattern.permute.xlu0 0
    %148 = vperm.xlu0 %147, %v72
    %v149 = vpop.permute.xlu0 %148
    %vm150 = vcmp.eq.s32.totalorder %v74, %v77
    %vm151 = vcmp.eq.s32.totalorder %v74, %v80
    %vm152 = vcmp.eq.s32.totalorder %v74, %v83
    %vm153 = vcmp.eq.s32.totalorder %v74, %v86
    %vm154 = vcmp.eq.s32.totalorder %v74, %v89
    %vm155 = vcmp.eq.s32.totalorder %v74, %v92
    %vm156 = vcmp.eq.s32.totalorder %v74, %v95
    %vm157 = vcmp.eq.s32.totalorder %v74, %v98
    %vm158 = vcmp.eq.s32.totalorder %v74, %v101
    %vm159 = vcmp.eq.s32.totalorder %v74, %v104
    %vm160 = vcmp.eq.s32.totalorder %v74, %v107
    %vm161 = vcmp.eq.s32.totalorder %v74, %v110
    %vm162 = vcmp.eq.s32.totalorder %v74, %v113
    %vm163 = vcmp.eq.s32.totalorder %v74, %v116
    %vm164 = vcmp.eq.s32.totalorder %v74, %v119
    %vm165 = vcmp.eq.s32.totalorder %v74, %v122
    %vm166 = vcmp.eq.s32.totalorder %v74, %v125
    %vm167 = vcmp.eq.s32.totalorder %v74, %v128
    %vm168 = vcmp.eq.s32.totalorder %v74, %v131
    %vm169 = vcmp.eq.s32.totalorder %v74, %v134
    %vm170 = vcmp.eq.s32.totalorder %v74, %v137
    %vm171 = vcmp.eq.s32.totalorder %v74, %v140
    %vm172 = vcmp.eq.s32.totalorder %v74, %v143
    %vm173 = vcmp.eq.s32.totalorder %v74, %v146
    %vm174 = vcmp.eq.s32.totalorder %v74, %v149
    %v175 = vsel %vm150, %v23, 0.0
    %v176 = vsel %vm151, %v24, 0.0
    %v177 = vsel %vm152, %v25, 0.0
    %v178 = vsel %vm153, %v26, 0.0
    %v179 = vsel %vm154, %v27, 0.0
    %v180 = vsel %vm155, %v28, 0.0
    %v181 = vsel %vm156, %v29, 0.0
    %v182 = vsel %vm157, %v30, 0.0
    %v183 = vsel %vm158, %v31, 0.0
    %v184 = vsel %vm159, %v32, 0.0
    %v185 = vsel %vm160, %v33, 0.0
    %v186 = vsel %vm161, %v34, 0.0
    %v187 = vsel %vm162, %v35, 0.0
    %v188 = vsel %vm163, %v36, 0.0
    %v189 = vsel %vm164, %v37, 0.0
    %v190 = vsel %vm165, %v38, 0.0
    %v191 = vsel %vm166, %v39, 0.0
    %v192 = vsel %vm167, %v40, 0.0
    %v193 = vsel %vm168, %v41, 0.0
    %v194 = vsel %vm169, %v42, 0.0
    %v195 = vsel %vm170, %v43, 0.0
    %v196 = vsel %vm171, %v44, 0.0
    %v197 = vsel %vm172, %v45, 0.0
    %v198 = vsel %vm173, %v46, 0.0
    %v199 = vsel %vm174, %v47, 0.0
    %vm200 = vcmask 80896
    %v201 = vsel %vm200, %v175, 0.0
    %202 = vadd.xlane.f32.xlu0 %v201
    %v203 = vpop.xlane.xlu0 %202
    %v204 = vsel %vm200, %v176, 0.0
    %205 = vadd.xlane.f32.xlu0 %v204
    %v206 = vpop.xlane.xlu0 %205
    %v207 = vsel %vm200, %v177, 0.0
    %208 = vadd.xlane.f32.xlu0 %v207
    %v209 = vpop.xlane.xlu0 %208
    %v210 = vsel %vm200, %v178, 0.0
    %211 = vadd.xlane.f32.xlu0 %v210
    %v212 = vpop.xlane.xlu0 %211
    %v213 = vsel %vm200, %v179, 0.0
    %214 = vadd.xlane.f32.xlu0 %v213
    %v215 = vpop.xlane.xlu0 %214
    %v216 = vsel %vm200, %v180, 0.0
    %217 = vadd.xlane.f32.xlu0 %v216
    %v218 = vpop.xlane.xlu0 %217
    %v219 = vsel %vm200, %v181, 0.0
    %220 = vadd.xlane.f32.xlu0 %v219
    %v221 = vpop.xlane.xlu0 %220
    %v222 = vsel %vm200, %v182, 0.0
    %223 = vadd.xlane.f32.xlu0 %v222
    %v224 = vpop.xlane.xlu0 %223
    %v225 = vsel %vm200, %v183, 0.0
    %226 = vadd.xlane.f32.xlu0 %v225
    %v227 = vpop.xlane.xlu0 %226
    %v228 = vsel %vm200, %v184, 0.0
    %229 = vadd.xlane.f32.xlu0 %v228
    %v230 = vpop.xlane.xlu0 %229
    %v231 = vsel %vm200, %v185, 0.0
    %232 = vadd.xlane.f32.xlu0 %v231
    %v233 = vpop.xlane.xlu0 %232
    %v234 = vsel %vm200, %v186, 0.0
    %235 = vadd.xlane.f32.xlu0 %v234
    %v236 = vpop.xlane.xlu0 %235
    %v237 = vsel %vm200, %v187, 0.0
    %238 = vadd.xlane.f32.xlu0 %v237
    %v239 = vpop.xlane.xlu0 %238
    %v240 = vsel %vm200, %v188, 0.0
    %241 = vadd.xlane.f32.xlu0 %v240
    %v242 = vpop.xlane.xlu0 %241
    %v243 = vsel %vm200, %v189, 0.0
    %244 = vadd.xlane.f32.xlu0 %v243
    %v245 = vpop.xlane.xlu0 %244
    %v246 = vsel %vm200, %v190, 0.0
    %247 = vadd.xlane.f32.xlu0 %v246
    %v248 = vpop.xlane.xlu0 %247
    %v249 = vsel %vm200, %v191, 0.0
    %250 = vadd.xlane.f32.xlu0 %v249
    %v251 = vpop.xlane.xlu0 %250
    %v252 = vsel %vm200, %v192, 0.0
    %253 = vadd.xlane.f32.xlu0 %v252
    %v254 = vpop.xlane.xlu0 %253
    %v255 = vsel %vm200, %v193, 0.0
    %256 = vadd.xlane.f32.xlu0 %v255
    %v257 = vpop.xlane.xlu0 %256
    %v258 = vsel %vm200, %v194, 0.0
    %259 = vadd.xlane.f32.xlu0 %v258
    %v260 = vpop.xlane.xlu0 %259
    %v261 = vsel %vm200, %v195, 0.0
    %262 = vadd.xlane.f32.xlu0 %v261
    %v263 = vpop.xlane.xlu0 %262
    %v264 = vsel %vm200, %v196, 0.0
    %265 = vadd.xlane.f32.xlu0 %v264
    %v266 = vpop.xlane.xlu0 %265
    %v267 = vsel %vm200, %v197, 0.0
    %268 = vadd.xlane.f32.xlu0 %v267
    %v269 = vpop.xlane.xlu0 %268
    %v270 = vsel %vm200, %v198, 0.0
    %271 = vadd.xlane.f32.xlu0 %v270
    %v272 = vpop.xlane.xlu0 %271
    %v273 = vsel %vm200, %v199, 0.0
    %274 = vadd.xlane.f32.xlu0 %v273
    %v275 = vpop.xlane.xlu0 %274
    %v276 = vstv %s22
    %v277 = vsub.f32 %v276, %v203
    %v278 = vsub.f32 %v276, %v206
    %v279 = vsub.f32 %v276, %v209
    %v280 = vsub.f32 %v276, %v212
    %v281 = vsub.f32 %v276, %v215
    %v282 = vsub.f32 %v276, %v218
    %v283 = vsub.f32 %v276, %v221
    %v284 = vsub.f32 %v276, %v224
    %v285 = vsub.f32 %v276, %v227
    %v286 = vsub.f32 %v276, %v230
    %v287 = vsub.f32 %v276, %v233
    %v288 = vsub.f32 %v276, %v236
    %v289 = vsub.f32 %v276, %v239
    %v290 = vsub.f32 %v276, %v242
    %v291 = vsub.f32 %v276, %v245
    %v292 = vsub.f32 %v276, %v248
    %v293 = vsub.f32 %v276, %v251
    %v294 = vsub.f32 %v276, %v254
    %v295 = vsub.f32 %v276, %v257
    %v296 = vsub.f32 %v276, %v260
    %v297 = vsub.f32 %v276, %v263
    %v298 = vsub.f32 %v276, %v266
    %v299 = vsub.f32 %v276, %v269
    %v300 = vsub.f32 %v276, %v272
    %v301 = vsub.f32 %v276, %v275
    %v302 = vadd.f32 %v277, %v23
    %v303 = vadd.f32 %v278, %v24
    %v304 = vadd.f32 %v279, %v25
    %v305 = vadd.f32 %v280, %v26
    %v306 = vadd.f32 %v281, %v27
    %v307 = vadd.f32 %v282, %v28
    %v308 = vadd.f32 %v283, %v29
    %v309 = vadd.f32 %v284, %v30
    %v310 = vadd.f32 %v285, %v31
    %v311 = vadd.f32 %v286, %v32
    %v312 = vadd.f32 %v287, %v33
    %v313 = vadd.f32 %v288, %v34
    %v314 = vadd.f32 %v289, %v35
    %v315 = vadd.f32 %v290, %v36
    %v316 = vadd.f32 %v291, %v37
    %v317 = vadd.f32 %v292, %v38
    %v318 = vadd.f32 %v293, %v39
    %v319 = vadd.f32 %v294, %v40
    %v320 = vadd.f32 %v295, %v41
    %v321 = vadd.f32 %v296, %v42
    %v322 = vadd.f32 %v297, %v43
    %v323 = vadd.f32 %v298, %v44
    %v324 = vadd.f32 %v299, %v45
    %v325 = vadd.f32 %v300, %v46
    %v326 = vadd.f32 %v301, %v47
    %v327 = vsel %vm150, 0.0, %v302
    %v328 = vsel %vm151, 0.0, %v303
    %v329 = vsel %vm152, 0.0, %v304
    %v330 = vsel %vm153, 0.0, %v305
    %v331 = vsel %vm154, 0.0, %v306
    %v332 = vsel %vm155, 0.0, %v307
    %v333 = vsel %vm156, 0.0, %v308
    %v334 = vsel %vm157, 0.0, %v309
    %v335 = vsel %vm158, 0.0, %v310
    %v336 = vsel %vm159, 0.0, %v311
    %v337 = vsel %vm160, 0.0, %v312
    %v338 = vsel %vm161, 0.0, %v313
    %v339 = vsel %vm162, 0.0, %v314
    %v340 = vsel %vm163, 0.0, %v315
    %v341 = vsel %vm164, 0.0, %v316
    %v342 = vsel %vm165, 0.0, %v317
    %v343 = vsel %vm166, 0.0, %v318
    %v344 = vsel %vm167, 0.0, %v319
    %v345 = vsel %vm168, 0.0, %v320
    %v346 = vsel %vm169, 0.0, %v321
    %v347 = vsel %vm170, 0.0, %v322
    %v348 = vsel %vm171, 0.0, %v323
    %v349 = vsel %vm172, 0.0, %v324
    %v350 = vsel %vm173, 0.0, %v325
    %v351 = vsel %vm174, 0.0, %v326
    %v352 = vmax.f32 %v327, 0.0
    %v353 = vmax.f32 %v328, 0.0
    %v354 = vmax.f32 %v329, 0.0
    %v355 = vmax.f32 %v330, 0.0
    %v356 = vmax.f32 %v331, 0.0
    %v357 = vmax.f32 %v332, 0.0
    %v358 = vmax.f32 %v333, 0.0
    %v359 = vmax.f32 %v334, 0.0
    %v360 = vmax.f32 %v335, 0.0
    %v361 = vmax.f32 %v336, 0.0
    %v362 = vmax.f32 %v337, 0.0
    %v363 = vmax.f32 %v338, 0.0
    %v364 = vmax.f32 %v339, 0.0
    %v365 = vmax.f32 %v340, 0.0
    %v366 = vmax.f32 %v341, 0.0
    %v367 = vmax.f32 %v342, 0.0
    %v368 = vmax.f32 %v343, 0.0
    %v369 = vmax.f32 %v344, 0.0
    %v370 = vmax.f32 %v345, 0.0
    %v371 = vmax.f32 %v346, 0.0
    %v372 = vmax.f32 %v347, 0.0
    %v373 = vmax.f32 %v348, 0.0
    %v374 = vmax.f32 %v349, 0.0
    %v375 = vmax.f32 %v350, 0.0
    %v376 = vmax.f32 %v351, 0.0
    %v377 = vmul.f32 %v352, %v352
    %v378 = vmul.f32 %v353, %v353
    %v379 = vmul.f32 %v354, %v354
    %v380 = vmul.f32 %v355, %v355
    %v381 = vmul.f32 %v356, %v356
    %v382 = vmul.f32 %v357, %v357
    %v383 = vmul.f32 %v358, %v358
    %v384 = vmul.f32 %v359, %v359
    %v385 = vmul.f32 %v360, %v360
    %v386 = vmul.f32 %v361, %v361
    %v387 = vmul.f32 %v362, %v362
    %v388 = vmul.f32 %v363, %v363
    %v389 = vmul.f32 %v364, %v364
    %v390 = vmul.f32 %v365, %v365
    %v391 = vmul.f32 %v366, %v366
    %v392 = vmul.f32 %v367, %v367
    %v393 = vmul.f32 %v368, %v368
    %v394 = vmul.f32 %v369, %v369
    %v395 = vmul.f32 %v370, %v370
    %v396 = vmul.f32 %v371, %v371
    %v397 = vmul.f32 %v372, %v372
    %v398 = vmul.f32 %v373, %v373
    %v399 = vmul.f32 %v374, %v374
    %v400 = vmul.f32 %v375, %v375
    %v401 = vmul.f32 %v376, %v376
    %s402 = smul.u32 0, 200
    %v403 = vlaneseq
    %v404 = vshrl.u32 %v403, 7
    %v405 = vadd.s32 %v404, 8
    %v406 = vadd.s32 %v404, 16
    %v407 = vadd.s32 %v404, 24
    %v408 = vadd.s32 %v404, 32
    %v409 = vadd.s32 %v404, 40
    %v410 = vadd.s32 %v404, 48
    %v411 = vadd.s32 %v404, 56
    %v412 = vadd.s32 %v404, 64
    %v413 = vadd.s32 %v404, 72
    %v414 = vadd.s32 %v404, 80
    %v415 = vadd.s32 %v404, 88
    %v416 = vadd.s32 %v404, 96
    %v417 = vadd.s32 %v404, 104
    %v418 = vadd.s32 %v404, 112
    %v419 = vadd.s32 %v404, 120
    %v420 = vadd.s32 %v404, 128
    %v421 = vadd.s32 %v404, 136
    %v422 = vadd.s32 %v404, 144
    %v423 = vadd.s32 %v404, 152
    %v424 = vadd.s32 %v404, 160
    %v425 = vadd.s32 %v404, 168
    %v426 = vadd.s32 %v404, 176
    %v427 = vadd.s32 %v404, 184
    %v428 = vadd.s32 %v404, 192
    %v429 = vstv %s402
    %v430 = vadd.s32 %v429, %v404
    %v431 = vadd.s32 %v429, %v405
    %v432 = vadd.s32 %v429, %v406
    %v433 = vadd.s32 %v429, %v407
    %v434 = vadd.s32 %v429, %v408
    %v435 = vadd.s32 %v429, %v409
    %v436 = vadd.s32 %v429, %v410
    %v437 = vadd.s32 %v429, %v411
    %v438 = vadd.s32 %v429, %v412
    %v439 = vadd.s32 %v429, %v413
    %v440 = vadd.s32 %v429, %v414
    %v441 = vadd.s32 %v429, %v415
    %v442 = vadd.s32 %v429, %v416
    %v443 = vadd.s32 %v429, %v417
    %v444 = vadd.s32 %v429, %v418
    %v445 = vadd.s32 %v429, %v419
    %v446 = vadd.s32 %v429, %v420
    %v447 = vadd.s32 %v429, %v421
    %v448 = vadd.s32 %v429, %v422
    %v449 = vadd.s32 %v429, %v423
    %v450 = vadd.s32 %v429, %v424
    %v451 = vadd.s32 %v429, %v425
    %v452 = vadd.s32 %v429, %v426
    %v453 = vadd.s32 %v429, %v427
    %v454 = vadd.s32 %v429, %v428
    %vm455 = vcmp.lt.s32.totalorder %v430, 200
    %vm456 = vcmp.lt.s32.totalorder %v431, 200
    %vm457 = vcmp.lt.s32.totalorder %v432, 200
    %vm458 = vcmp.lt.s32.totalorder %v433, 200
    %vm459 = vcmp.lt.s32.totalorder %v434, 200
    %vm460 = vcmp.lt.s32.totalorder %v435, 200
    %vm461 = vcmp.lt.s32.totalorder %v436, 200
    %vm462 = vcmp.lt.s32.totalorder %v437, 200
    %vm463 = vcmp.lt.s32.totalorder %v438, 200
    %vm464 = vcmp.lt.s32.totalorder %v439, 200
    %vm465 = vcmp.lt.s32.totalorder %v440, 200
    %vm466 = vcmp.lt.s32.totalorder %v441, 200
    %vm467 = vcmp.lt.s32.totalorder %v442, 200
    %vm468 = vcmp.lt.s32.totalorder %v443, 200
    %vm469 = vcmp.lt.s32.totalorder %v444, 200
    %vm470 = vcmp.lt.s32.totalorder %v445, 200
    %vm471 = vcmp.lt.s32.totalorder %v446, 200
    %vm472 = vcmp.lt.s32.totalorder %v447, 200
    %vm473 = vcmp.lt.s32.totalorder %v448, 200
    %vm474 = vcmp.lt.s32.totalorder %v449, 200
    %vm475 = vcmp.lt.s32.totalorder %v450, 200
    %vm476 = vcmp.lt.s32.totalorder %v451, 200
    %vm477 = vcmp.lt.s32.totalorder %v452, 200
    %vm478 = vcmp.lt.s32.totalorder %v453, 200
    %vm479 = vcmp.lt.s32.totalorder %v454, 200
    %v480 = vsel %vm455, %v377, 0.0
    %v481 = vsel %vm456, %v378, 0.0
    %v482 = vsel %vm457, %v379, 0.0
    %v483 = vsel %vm458, %v380, 0.0
    %v484 = vsel %vm459, %v381, 0.0
    %v485 = vsel %vm460, %v382, 0.0
    %v486 = vsel %vm461, %v383, 0.0
    %v487 = vsel %vm462, %v384, 0.0
    %v488 = vsel %vm463, %v385, 0.0
    %v489 = vsel %vm464, %v386, 0.0
    %v490 = vsel %vm465, %v387, 0.0
    %v491 = vsel %vm466, %v388, 0.0
    %v492 = vsel %vm467, %v389, 0.0
    %v493 = vsel %vm468, %v390, 0.0
    %v494 = vsel %vm469, %v391, 0.0
    %v495 = vsel %vm470, %v392, 0.0
    %v496 = vsel %vm471, %v393, 0.0
    %v497 = vsel %vm472, %v394, 0.0
    %v498 = vsel %vm473, %v395, 0.0
    %v499 = vsel %vm474, %v396, 0.0
    %v500 = vsel %vm475, %v397, 0.0
    %v501 = vsel %vm476, %v398, 0.0
    %v502 = vsel %vm477, %v399, 0.0
    %v503 = vsel %vm478, %v400, 0.0
    %v504 = vsel %vm479, %v401, 0.0
    %s505 = sld [smem:[#allocation2]]
    %v506 = vsel %vm200, %v480, 0.0
    %v507 = vsel %vm200, %v481, 0.0
    %v508 = vadd.f32 %v506, %v507
    %v509 = vsel %vm200, %v482, 0.0
    %v510 = vadd.f32 %v508, %v509
    %v511 = vsel %vm200, %v483, 0.0
    %v512 = vadd.f32 %v510, %v511
    %v513 = vsel %vm200, %v484, 0.0
    %v514 = vadd.f32 %v512, %v513
    %v515 = vsel %vm200, %v485, 0.0
    %v516 = vadd.f32 %v514, %v515
    %v517 = vsel %vm200, %v486, 0.0
    %v518 = vadd.f32 %v516, %v517
    %v519 = vsel %vm200, %v487, 0.0
    %v520 = vadd.f32 %v518, %v519
    %v521 = vsel %vm200, %v488, 0.0
    %v522 = vadd.f32 %v520, %v521
    %v523 = vsel %vm200, %v489, 0.0
    %v524 = vadd.f32 %v522, %v523
    %v525 = vsel %vm200, %v490, 0.0
    %v526 = vadd.f32 %v524, %v525
    %v527 = vsel %vm200, %v491, 0.0
    %v528 = vadd.f32 %v526, %v527
    %v529 = vsel %vm200, %v492, 0.0
    %v530 = vadd.f32 %v528, %v529
    %v531 = vsel %vm200, %v493, 0.0
    %v532 = vadd.f32 %v530, %v531
    %v533 = vsel %vm200, %v494, 0.0
    %v534 = vadd.f32 %v532, %v533
    %v535 = vsel %vm200, %v495, 0.0
    %v536 = vadd.f32 %v534, %v535
    %v537 = vsel %vm200, %v496, 0.0
    %v538 = vadd.f32 %v536, %v537
    %v539 = vsel %vm200, %v497, 0.0
    %v540 = vadd.f32 %v538, %v539
    %v541 = vsel %vm200, %v498, 0.0
    %v542 = vadd.f32 %v540, %v541
    %v543 = vsel %vm200, %v499, 0.0
    %v544 = vadd.f32 %v542, %v543
    %v545 = vsel %vm200, %v500, 0.0
    %v546 = vadd.f32 %v544, %v545
    %v547 = vsel %vm200, %v501, 0.0
    %v548 = vadd.f32 %v546, %v547
    %v549 = vsel %vm200, %v502, 0.0
    %v550 = vadd.f32 %v548, %v549
    %v551 = vsel %vm200, %v503, 0.0
    %v552 = vadd.f32 %v550, %v551
    %v553 = vsel %vm200, %v504, 0.0
    %v554 = vadd.f32 %v552, %v553
    %555 = vadd.xlane.f32.xlu0 %v554
    %v556 = vpop.xlane.xlu0 %555
    %v557 = vrot.slane %v556, 4
    %v558 = vadd.f32 %v556, %v557
    %v559 = vrot.slane %v558, 2
    %v560 = vadd.f32 %v558, %v559
    %v561 = vrot.slane %v560, 1
    %v562 = vadd.f32 %v560, %v561
    %s563 = vtos %v562
    %s564 = sadd.f32 %s505, %s563
    %s565 = scalar_lea.smem [#allocation2], 0
    %566 = sst [smem:[%s565]] %s564
    // Predicated region
    $region18: #{tpu_custom_call.1} parent=1 // pred_check
      %p567 = pneg %p16
    $region19: #{tpu_custom_call.1} parent=1 // pred_check_branch
      %569 = sbr.rel (%p567) target = $region21
    $region20: #{tpu_custom_call.1} parent=1 // pred_region
      %s570 = sld [smem:[#allocation2]]
      %s571 = smul.f32 %s570, 0.005
      %s572 = scalar_lea.smem [#allocation4], 0
      %573 = sst [smem:[%s572]] %s571
    $region21: #{tpu_custom_call.1} parent=1 // pred_fallthru
      _
    // Predicated region
    $region22: #{tpu_custom_call.1} parent=1 // pred_check
      _
    $region23: #{tpu_custom_call.1} parent=1 // pred_check_branch
      %575 = sbr.rel (0) target = $region25
    $region24: #{tpu_custom_call.1} parent=1 // pred_region
      %577 = vsyncadd [#allocation5], 0
      %s579 = sshll.u32 %s3, 4
      %s580 = int_to_ptr.hbm [resolvable:$true] %s579
      %582 = dma.smem_to_hbm [#allocation4], 16, %s580, [#allocation5]
    $region25: #{tpu_custom_call.1} parent=1 // pred_fallthru
      _
    // Predicated region
    $region26: #{tpu_custom_call.1} parent=1 // pred_check
      _
    $region27: #{tpu_custom_call.1} parent=1 // pred_check_branch
      %584 = sbr.rel (0) target = $region29
    $region28: #{tpu_custom_call.1} parent=1 // pred_region
      %586 = dma.done [#allocation5], 16
    $region29: #{tpu_custom_call.1} parent=1 // pred_fallthru
      _
    %587 = sfence
    %588 = vsyncpa [#allocation5], 1

</llo_original>
